<compile_context>
chip_gen: v6e
topology: v6e:2x2x1
jax: 0.10.0
libtpu: 0.0.40
codegen_flags: <defaults>
</compile_context>

<pallas_src>
import functools

import jax
import jax.numpy as jnp
from jax.experimental import pallas as pl
from jax.experimental.pallas import tpu as pltpu


# Static filter constants (baked into the kernel as immediates).
_KV = (
    (-1.0,  2.0,  -2.0,  2.0, -1.0),
    ( 2.0, -6.0,   8.0, -6.0,  2.0),
    (-2.0,  8.0, -12.0,  8.0, -2.0),
    ( 2.0, -6.0,   8.0, -6.0,  2.0),
    (-1.0,  2.0,  -2.0,  2.0, -1.0),
)
_GRAY = (0.2989, 0.587, 0.114)


# ---------------------------------------------------------------------------
# Pallas kernel
# ---------------------------------------------------------------------------
def _imageproc_kernel(x_ref, o_ref, gpad_ref, *, H, W):
    """Grayscale + 5x5 KV filter for one batch element, all on the VPU.

    x_ref    : (1, 3, H, W)    input channel planes (f32)
    o_ref    : (1, H, W)       filtered grayscale plane (f32)
    gpad_ref : (H+4, W+4) VMEM scratch -- zero-padded grayscale plane
    """
    # Scratch persists across grid steps -> re-zero, then write the interior.
    gpad_ref[...] = jnp.zeros_like(gpad_ref)

    # Grayscale: 3 scalar*plane FMAs on the VPU (no matmul, no channel gather).
    gray = (_GRAY[0] * x_ref[0, 0]
            + _GRAY[1] * x_ref[0, 1]
            + _GRAY[2] * x_ref[0, 2])
    gpad_ref[pl.ds(2, H), pl.ds(2, W)] = gray

    # 5x5 KV filter (padding=2) as 25 statically shifted accumulates.
    acc = jnp.zeros((H, W), jnp.float32)
    for di in range(5):
        for dj in range(5):
            coeff = _KV[di][dj] / 12.0
            acc = acc + coeff * gpad_ref[pl.ds(di, H), pl.ds(dj, W)]

    o_ref[0] = acc


# ---------------------------------------------------------------------------
# Wrapper
# ---------------------------------------------------------------------------
def image_processing(inp):
    """Pallas forward of ImageProcessing: (B, 3, H, W) -> (B, 1, H, W)."""
    B, C, H, W = inp.shape
    assert C == 3, "ImageProcessing expects a 3-channel (RGB) input"
    x = inp.astype(jnp.float32)

    kernel = functools.partial(_imageproc_kernel, H=H, W=W)

    # Rough per-step VMEM need: double-buffered input + output, plus scratch.
    vmem_est = 4 * (2 * 3 * H * W + 2 * H * W + (H + 4) * (W + 4)) + (1 << 20)
    vmem_limit = int(max(vmem_est, 32 * 1024 * 1024))

    out = pl.pallas_call(
        kernel,
        out_shape=jax.ShapeDtypeStruct((B, H, W), jnp.float32),
        grid=(B,),
        in_specs=[pl.BlockSpec((1, 3, H, W), lambda b: (b, 0, 0, 0))],
        out_specs=pl.BlockSpec((1, H, W), lambda b: (b, 0, 0)),
        scratch_shapes=[pltpu.VMEM((H + 4, W + 4), jnp.float32)],
        compiler_params=pltpu.CompilerParams(
            dimension_semantics=("parallel",),
            vmem_limit_bytes=vmem_limit,
        ),
    )(x)
    return out.reshape(B, 1, H, W)


# ---------------------------------------------------------------------------
# Self-test
# ---------------------------------------------------------------------------
if __name__ == "__main__":
    key = jax.random.PRNGKey(0)
    B, H, W = 2, 16, 16
    image = jax.random.uniform(key, (B, 3, H, W), jnp.float32, 0.0, 255.0)

    out = jax.block_until_ready(image_processing(image))

    # Pure-JAX reference via an independent path (einsum + lax conv).
    g = jnp.array(_GRAY, jnp.float32)
    gray_ref = jnp.einsum("bchw,c->bhw", image, g)[:, None]          # (B,1,H,W)
    kv = jnp.array(_KV, jnp.float32) / 12.0
    ref = jax.lax.conv_general_dilated(
        gray_ref, kv[None, None],
        window_strides=(1, 1), padding=((2, 2), (2, 2)))

    assert out.shape == (B, 1, H, W), out.shape
    assert bool(jnp.all(jnp.isfinite(out)))
    max_err = float(jnp.max(jnp.abs(out - ref)))
    assert bool(jnp.allclose(out, ref, rtol=1e-4, atol=2e-2)), max_err
    print("KERNEL_OK")
</pallas_src>

<mosaic_0001>
module attributes {stable_mosaic.version = 11 : i64} {
  func.func @_imageproc_kernel(%arg0: i32, %arg1: memref<1x3x16x16xf32, #tpu.memory_space<vmem>>, %arg2: memref<1x16x16xf32, #tpu.memory_space<vmem>>, %arg3: memref<20x20xf32, #tpu.memory_space<vmem>>) attributes {dimension_semantics = [#tpu.dimension_semantics<parallel>], iteration_bounds = array<i64: 2>, scalar_prefetch = 0 : i64, scratch_operands = 1 : i64, tpu.core_type = #tpu.core_type<tc>, window_params = [{transform_indices = @transform_0, window_bounds = array<i64: 1, 3, 16, 16>}, {transform_indices = @transform_1, window_bounds = array<i64: 1, 16, 16>}]} {
    %cst = arith.constant 0.000000e+00 : f32
    %0 = vector.broadcast %cst : f32 to vector<20x20xf32>
    %c0 = arith.constant 0 : index
    %c0_0 = arith.constant 0 : index
    %1 = vector.load %arg3[%c0, %c0_0] : memref<20x20xf32, #tpu.memory_space<vmem>>, vector<20x20xf32>
    tpu.vector_store %arg3[%c0, %c0_0], %0 {strides = array<i32>} : memref<20x20xf32, #tpu.memory_space<vmem>>, vector<20x20xf32>,
    %c0_1 = arith.constant 0 : index
    %c0_2 = arith.constant 0 : index
    %c0_3 = arith.constant 0 : index
    %c0_4 = arith.constant 0 : index
    %2 = vector.load %arg1[%c0_1, %c0_2, %c0_3, %c0_4] : memref<1x3x16x16xf32, #tpu.memory_space<vmem>>, vector<1x1x16x16xf32>
    %3 = vector.shape_cast %2 : vector<1x1x16x16xf32> to vector<16x16xf32>
    %cst_5 = arith.constant 2.989000e-01 : f32
    %4 = vector.broadcast %cst_5 : f32 to vector<16x16xf32>
    %5 = arith.mulf %4, %3 : vector<16x16xf32>
    %c0_6 = arith.constant 0 : index
    %c1 = arith.constant 1 : index
    %c0_7 = arith.constant 0 : index
    %c0_8 = arith.constant 0 : index
    %6 = vector.load %arg1[%c0_6, %c1, %c0_7, %c0_8] : memref<1x3x16x16xf32, #tpu.memory_space<vmem>>, vector<1x1x16x16xf32>
    %7 = vector.shape_cast %6 : vector<1x1x16x16xf32> to vector<16x16xf32>
    %cst_9 = arith.constant 5.870000e-01 : f32
    %8 = vector.broadcast %cst_9 : f32 to vector<16x16xf32>
    %9 = arith.mulf %8, %7 : vector<16x16xf32>
    %10 = arith.addf %5, %9 : vector<16x16xf32>
    %c0_10 = arith.constant 0 : index
    %c2 = arith.constant 2 : index
    %c0_11 = arith.constant 0 : index
    %c0_12 = arith.constant 0 : index
    %11 = vector.load %arg1[%c0_10, %c2, %c0_11, %c0_12] : memref<1x3x16x16xf32, #tpu.memory_space<vmem>>, vector<1x1x16x16xf32>
    %12 = vector.shape_cast %11 : vector<1x1x16x16xf32> to vector<16x16xf32>
    %cst_13 = arith.constant 1.140000e-01 : f32
    %13 = vector.broadcast %cst_13 : f32 to vector<16x16xf32>
    %14 = arith.mulf %13, %12 : vector<16x16xf32>
    %15 = arith.addf %10, %14 : vector<16x16xf32>
    %c2_14 = arith.constant 2 : index
    %c2_15 = arith.constant 2 : index
    %16 = vector.load %arg3[%c2_14, %c2_15] : memref<20x20xf32, #tpu.memory_space<vmem>>, vector<16x16xf32>
    tpu.vector_store %arg3[%c2_14, %c2_15], %15 {strides = array<i32>} : memref<20x20xf32, #tpu.memory_space<vmem>>, vector<16x16xf32>,
    %cst_16 = arith.constant 0.000000e+00 : f32
    %17 = vector.broadcast %cst_16 : f32 to vector<16x16xf32>
    %c0_17 = arith.constant 0 : index
    %c0_18 = arith.constant 0 : index
    %18 = vector.load %arg3[%c0_17, %c0_18] : memref<20x20xf32, #tpu.memory_space<vmem>>, vector<16x16xf32>
    %cst_19 = arith.constant -0.0833333358 : f32
    %19 = vector.broadcast %cst_19 : f32 to vector<16x16xf32>
    %20 = arith.mulf %19, %18 : vector<16x16xf32>
    %21 = arith.addf %17, %20 : vector<16x16xf32>
    %c0_20 = arith.constant 0 : index
    %c1_21 = arith.constant 1 : index
    %22 = vector.load %arg3[%c0_20, %c1_21] : memref<20x20xf32, #tpu.memory_space<vmem>>, vector<16x16xf32>
    %cst_22 = arith.constant 0.166666672 : f32
    %23 = vector.broadcast %cst_22 : f32 to vector<16x16xf32>
    %24 = arith.mulf %23, %22 : vector<16x16xf32>
    %25 = arith.addf %21, %24 : vector<16x16xf32>
    %c0_23 = arith.constant 0 : index
    %c2_24 = arith.constant 2 : index
    %26 = vector.load %arg3[%c0_23, %c2_24] : memref<20x20xf32, #tpu.memory_space<vmem>>, vector<16x16xf32>
    %cst_25 = arith.constant -0.166666672 : f32
    %27 = vector.broadcast %cst_25 : f32 to vector<16x16xf32>
    %28 = arith.mulf %27, %26 : vector<16x16xf32>
    %29 = arith.addf %25, %28 : vector<16x16xf32>
    %c0_26 = arith.constant 0 : index
    %c3 = arith.constant 3 : index
    %30 = vector.load %arg3[%c0_26, %c3] : memref<20x20xf32, #tpu.memory_space<vmem>>, vector<16x16xf32>
    %cst_27 = arith.constant 0.166666672 : f32
    %31 = vector.broadcast %cst_27 : f32 to vector<16x16xf32>
    %32 = arith.mulf %31, %30 : vector<16x16xf32>
    %33 = arith.addf %29, %32 : vector<16x16xf32>
    %c0_28 = arith.constant 0 : index
    %c4 = arith.constant 4 : index
    %34 = vector.load %arg3[%c0_28, %c4] : memref<20x20xf32, #tpu.memory_space<vmem>>, vector<16x16xf32>
    %cst_29 = arith.constant -0.0833333358 : f32
    %35 = vector.broadcast %cst_29 : f32 to vector<16x16xf32>
    %36 = arith.mulf %35, %34 : vector<16x16xf32>
    %37 = arith.addf %33, %36 : vector<16x16xf32>
    %c1_30 = arith.constant 1 : index
    %c0_31 = arith.constant 0 : index
    %38 = vector.load %arg3[%c1_30, %c0_31] : memref<20x20xf32, #tpu.memory_space<vmem>>, vector<16x16xf32>
    %cst_32 = arith.constant 0.166666672 : f32
    %39 = vector.broadcast %cst_32 : f32 to vector<16x16xf32>
    %40 = arith.mulf %39, %38 : vector<16x16xf32>
    %41 = arith.addf %37, %40 : vector<16x16xf32>
    %c1_33 = arith.constant 1 : index
    %c1_34 = arith.constant 1 : index
    %42 = vector.load %arg3[%c1_33, %c1_34] : memref<20x20xf32, #tpu.memory_space<vmem>>, vector<16x16xf32>
    %cst_35 = arith.constant -5.000000e-01 : f32
    %43 = vector.broadcast %cst_35 : f32 to vector<16x16xf32>
    %44 = arith.mulf %43, %42 : vector<16x16xf32>
    %45 = arith.addf %41, %44 : vector<16x16xf32>
    %c1_36 = arith.constant 1 : index
    %c2_37 = arith.constant 2 : index
    %46 = vector.load %arg3[%c1_36, %c2_37] : memref<20x20xf32, #tpu.memory_space<vmem>>, vector<16x16xf32>
    %cst_38 = arith.constant 0.666666686 : f32
    %47 = vector.broadcast %cst_38 : f32 to vector<16x16xf32>
    %48 = arith.mulf %47, %46 : vector<16x16xf32>
    %49 = arith.addf %45, %48 : vector<16x16xf32>
    %c1_39 = arith.constant 1 : index
    %c3_40 = arith.constant 3 : index
    %50 = vector.load %arg3[%c1_39, %c3_40] : memref<20x20xf32, #tpu.memory_space<vmem>>, vector<16x16xf32>
    %cst_41 = arith.constant -5.000000e-01 : f32
    %51 = vector.broadcast %cst_41 : f32 to vector<16x16xf32>
    %52 = arith.mulf %51, %50 : vector<16x16xf32>
    %53 = arith.addf %49, %52 : vector<16x16xf32>
    %c1_42 = arith.constant 1 : index
    %c4_43 = arith.constant 4 : index
    %54 = vector.load %arg3[%c1_42, %c4_43] : memref<20x20xf32, #tpu.memory_space<vmem>>, vector<16x16xf32>
    %cst_44 = arith.constant 0.166666672 : f32
    %55 = vector.broadcast %cst_44 : f32 to vector<16x16xf32>
    %56 = arith.mulf %55, %54 : vector<16x16xf32>
    %57 = arith.addf %53, %56 : vector<16x16xf32>
    %c2_45 = arith.constant 2 : index
    %c0_46 = arith.constant 0 : index
    %58 = vector.load %arg3[%c2_45, %c0_46] : memref<20x20xf32, #tpu.memory_space<vmem>>, vector<16x16xf32>
    %cst_47 = arith.constant -0.166666672 : f32
    %59 = vector.broadcast %cst_47 : f32 to vector<16x16xf32>
    %60 = arith.mulf %59, %58 : vector<16x16xf32>
    %61 = arith.addf %57, %60 : vector<16x16xf32>
    %c2_48 = arith.constant 2 : index
    %c1_49 = arith.constant 1 : index
    %62 = vector.load %arg3[%c2_48, %c1_49] : memref<20x20xf32, #tpu.memory_space<vmem>>, vector<16x16xf32>
    %cst_50 = arith.constant 0.666666686 : f32
    %63 = vector.broadcast %cst_50 : f32 to vector<16x16xf32>
    %64 = arith.mulf %63, %62 : vector<16x16xf32>
    %65 = arith.addf %61, %64 : vector<16x16xf32>
    %c2_51 = arith.constant 2 : index
    %c2_52 = arith.constant 2 : index
    %66 = vector.load %arg3[%c2_51, %c2_52] : memref<20x20xf32, #tpu.memory_space<vmem>>, vector<16x16xf32>
    %cst_53 = arith.constant -1.000000e+00 : f32
    %67 = vector.broadcast %cst_53 : f32 to vector<16x16xf32>
    %68 = arith.mulf %67, %66 : vector<16x16xf32>
    %69 = arith.addf %65, %68 : vector<16x16xf32>
    %c2_54 = arith.constant 2 : index
    %c3_55 = arith.constant 3 : index
    %70 = vector.load %arg3[%c2_54, %c3_55] : memref<20x20xf32, #tpu.memory_space<vmem>>, vector<16x16xf32>
    %cst_56 = arith.constant 0.666666686 : f32
    %71 = vector.broadcast %cst_56 : f32 to vector<16x16xf32>
    %72 = arith.mulf %71, %70 : vector<16x16xf32>
    %73 = arith.addf %69, %72 : vector<16x16xf32>
    %c2_57 = arith.constant 2 : index
    %c4_58 = arith.constant 4 : index
    %74 = vector.load %arg3[%c2_57, %c4_58] : memref<20x20xf32, #tpu.memory_space<vmem>>, vector<16x16xf32>
    %cst_59 = arith.constant -0.166666672 : f32
    %75 = vector.broadcast %cst_59 : f32 to vector<16x16xf32>
    %76 = arith.mulf %75, %74 : vector<16x16xf32>
    %77 = arith.addf %73, %76 : vector<16x16xf32>
    %c3_60 = arith.constant 3 : index
    %c0_61 = arith.constant 0 : index
    %78 = vector.load %arg3[%c3_60, %c0_61] : memref<20x20xf32, #tpu.memory_space<vmem>>, vector<16x16xf32>
    %cst_62 = arith.constant 0.166666672 : f32
    %79 = vector.broadcast %cst_62 : f32 to vector<16x16xf32>
    %80 = arith.mulf %79, %78 : vector<16x16xf32>
    %81 = arith.addf %77, %80 : vector<16x16xf32>
    %c3_63 = arith.constant 3 : index
    %c1_64 = arith.constant 1 : index
    %82 = vector.load %arg3[%c3_63, %c1_64] : memref<20x20xf32, #tpu.memory_space<vmem>>, vector<16x16xf32>
    %cst_65 = arith.constant -5.000000e-01 : f32
    %83 = vector.broadcast %cst_65 : f32 to vector<16x16xf32>
    %84 = arith.mulf %83, %82 : vector<16x16xf32>
    %85 = arith.addf %81, %84 : vector<16x16xf32>
    %c3_66 = arith.constant 3 : index
    %c2_67 = arith.constant 2 : index
    %86 = vector.load %arg3[%c3_66, %c2_67] : memref<20x20xf32, #tpu.memory_space<vmem>>, vector<16x16xf32>
    %cst_68 = arith.constant 0.666666686 : f32
    %87 = vector.broadcast %cst_68 : f32 to vector<16x16xf32>
    %88 = arith.mulf %87, %86 : vector<16x16xf32>
    %89 = arith.addf %85, %88 : vector<16x16xf32>
    %c3_69 = arith.constant 3 : index
    %c3_70 = arith.constant 3 : index
    %90 = vector.load %arg3[%c3_69, %c3_70] : memref<20x20xf32, #tpu.memory_space<vmem>>, vector<16x16xf32>
    %cst_71 = arith.constant -5.000000e-01 : f32
    %91 = vector.broadcast %cst_71 : f32 to vector<16x16xf32>
    %92 = arith.mulf %91, %90 : vector<16x16xf32>
    %93 = arith.addf %89, %92 : vector<16x16xf32>
    %c3_72 = arith.constant 3 : index
    %c4_73 = arith.constant 4 : index
    %94 = vector.load %arg3[%c3_72, %c4_73] : memref<20x20xf32, #tpu.memory_space<vmem>>, vector<16x16xf32>
    %cst_74 = arith.constant 0.166666672 : f32
    %95 = vector.broadcast %cst_74 : f32 to vector<16x16xf32>
    %96 = arith.mulf %95, %94 : vector<16x16xf32>
    %97 = arith.addf %93, %96 : vector<16x16xf32>
    %c4_75 = arith.constant 4 : index
    %c0_76 = arith.constant 0 : index
    %98 = vector.load %arg3[%c4_75, %c0_76] : memref<20x20xf32, #tpu.memory_space<vmem>>, vector<16x16xf32>
    %cst_77 = arith.constant -0.0833333358 : f32
    %99 = vector.broadcast %cst_77 : f32 to vector<16x16xf32>
    %100 = arith.mulf %99, %98 : vector<16x16xf32>
    %101 = arith.addf %97, %100 : vector<16x16xf32>
    %c4_78 = arith.constant 4 : index
    %c1_79 = arith.constant 1 : index
    %102 = vector.load %arg3[%c4_78, %c1_79] : memref<20x20xf32, #tpu.memory_space<vmem>>, vector<16x16xf32>
    %cst_80 = arith.constant 0.166666672 : f32
    %103 = vector.broadcast %cst_80 : f32 to vector<16x16xf32>
    %104 = arith.mulf %103, %102 : vector<16x16xf32>
    %105 = arith.addf %101, %104 : vector<16x16xf32>
    %c4_81 = arith.constant 4 : index
    %c2_82 = arith.constant 2 : index
    %106 = vector.load %arg3[%c4_81, %c2_82] : memref<20x20xf32, #tpu.memory_space<vmem>>, vector<16x16xf32>
    %cst_83 = arith.constant -0.166666672 : f32
    %107 = vector.broadcast %cst_83 : f32 to vector<16x16xf32>
    %108 = arith.mulf %107, %106 : vector<16x16xf32>
    %109 = arith.addf %105, %108 : vector<16x16xf32>
    %c4_84 = arith.constant 4 : index
    %c3_85 = arith.constant 3 : index
    %110 = vector.load %arg3[%c4_84, %c3_85] : memref<20x20xf32, #tpu.memory_space<vmem>>, vector<16x16xf32>
    %cst_86 = arith.constant 0.166666672 : f32
    %111 = vector.broadcast %cst_86 : f32 to vector<16x16xf32>
    %112 = arith.mulf %111, %110 : vector<16x16xf32>
    %113 = arith.addf %109, %112 : vector<16x16xf32>
    %c4_87 = arith.constant 4 : index
    %c4_88 = arith.constant 4 : index
    %114 = vector.load %arg3[%c4_87, %c4_88] : memref<20x20xf32, #tpu.memory_space<vmem>>, vector<16x16xf32>
    %cst_89 = arith.constant -0.0833333358 : f32
    %115 = vector.broadcast %cst_89 : f32 to vector<16x16xf32>
    %116 = arith.mulf %115, %114 : vector<16x16xf32>
    %117 = arith.addf %113, %116 : vector<16x16xf32>
    %c0_90 = arith.constant 0 : index
    %c0_91 = arith.constant 0 : index
    %c0_92 = arith.constant 0 : index
    %118 = vector.load %arg2[%c0_90, %c0_91, %c0_92] : memref<1x16x16xf32, #tpu.memory_space<vmem>>, vector<1x16x16xf32>
    %119 = vector.shape_cast %118 : vector<1x16x16xf32> to vector<16x16xf32>
    %120 = vector.shape_cast %117 : vector<16x16xf32> to vector<1x16x16xf32>
    tpu.vector_store %arg2[%c0_90, %c0_91, %c0_92], %120 {strides = array<i32>} : memref<1x16x16xf32, #tpu.memory_space<vmem>>, vector<1x16x16xf32>,
    return
  }
  func.func @transform_0(%arg0: i32) -> (i32, i32, i32, i32) {
    %c0_i32 = arith.constant 0 : i32
    %c0_i32_0 = arith.constant 0 : i32
    %c0_i32_1 = arith.constant 0 : i32
    %c0_i32_2 = arith.constant 0 : i32
    return %arg0, %c0_i32, %c0_i32_0, %c0_i32_1 : i32, i32, i32, i32
  }
  func.func @transform_1(%arg0: i32) -> (i32, i32, i32) {
    %c0_i32 = arith.constant 0 : i32
    %c0_i32_0 = arith.constant 0 : i32
    %c0_i32_1 = arith.constant 0 : i32
    return %arg0, %c0_i32, %c0_i32_0 : i32, i32, i32
  }
}

</mosaic_0001>

<llo_original>
// kernel: tpu_custom_call.1
$region0: #{tpu_custom_call.1}
  #allocation0 [shape = 'u32[]', space=smem, size = 0x4, offset = 0x4, fixed_abs, tag = 'smem constant byte address 0x4 - core index']
  #allocation1 [shape = 'u32[144,128]{1,0:T(1,128)}', space=vmem, size = 0x12000, scoped, tag = 'internal scratch']
  #allocation2 [shape = 'f32[20,20]{1,0:T(8,128)}', space=vmem, size = 0x3000, scoped, tag = 'scratch operand']
  %s0 = inlined_call_operand.hbm [shape: f32[2,3,16,16], index: 0, kind: input, shape index: {}]
  %s1 = inlined_call_operand.hbm [shape: f32[2,16,16], index: 1, kind: output, shape index: {}]
  %s2 = sld [smem:[#allocation0]]
  $region41: #{tpu_custom_call.1} parent=0
    _
  %s4 = ssub.s32 1, %s2
  %s5 = scalar_select 0, %s4, %s2
  $region1: #{tpu_custom_call.1} parent=0
    #allocation3 [shape = 'u8[49152]{0}', space=vmem, size = 0xc000, scoped, tag = 'input window, operand 0']
    #allocation4 [shape = 's32[2]{0}', space=sflag, size = 0x8, scoped, tag = 'scoped memory for tpu_custom_call.1']
    #allocation5 [shape = 's32[2]{0}', space=sflag, size = 0x8, scoped, tag = 'scoped memory for tpu_custom_call.1']
    #allocation6 [shape = 'u8[16384]{0}', space=vmem, size = 0x4000, scoped, tag = 'output window, operand 0']
    %6 = vsyncpa [#allocation4], 0
    %s7 = scalar_lea.sflag [#allocation4], 1
    %8 = vsyncpa %s7, 0
    %9 = vsyncpa [#allocation5], 0
    %s10 = scalar_lea.sflag [#allocation5], 1
    %11 = vsyncpa %s10, 0
    loop: start=0, step=1, limit=4
    $region2: #{tpu_custom_call.1} parent=1 // loop_pre_header
      _
    $region3: #{tpu_custom_call.1} parent=1 // loop_header
      %s13 = sphi 0, %s17
      %p14 = scmp.ge.s32.totalorder %s13, 4
      %s23 = sphi 0, %s25
      %s26 = sphi 0, %s23
      %s27 = sphi 0, %s26
      %s43 = sphi 0, %s27
      %s49 = sphi 0, %s51
      %s52 = sphi 0, %s49
      %s53 = sphi 0, %s52
      %s69 = sphi 0, %s53
    $region4: #{tpu_custom_call.1} parent=1 // loop_header_branch
      %16 = sbr.rel (%p14) target = $region8
    $region5: #{tpu_custom_call.1} parent=1 // loop_body
      %s18 = ssub.s32 %s13, 1
      %s19 = ssub.s32 %s13, 2
      %s20 = sadd.s32 %s13, 1
      %s21 = ssub.s32 %s13, %s20
      %p22 = scmp.eq.s32.totalorder %s21, 0
      %s24 = sadd.s32 %s23, 1
      %s25 = scalar_select %p22, %s23, %s24
      %p28 = pneg %p22
      %p29 = scmp.eq.s32.totalorder %s13, 1
      %p30 = por %p28, %p29
      %p31 = scmp.ne.s32.totalorder %s23, %s26
      %p32 = scmp.eq.s32.totalorder %s13, 0
      %p33 = por %p31, %p32
      %p34 = scmp.ne.s32.totalorder %s23, %s26
      %p35 = scmp.eq.s32.totalorder %s18, 1
      %p36 = por %p34, %p35
      %p37 = scmp.ne.s32.totalorder %s26, %s27
      %p38 = scmp.eq.s32.totalorder %s18, 0
      %p39 = por %p37, %p38
      %p40 = scmp.ne.s32.totalorder %s26, %s27
      %p41 = scmp.eq.s32.totalorder %s19, 1
      %p42 = por %p40, %p41
      %p44 = scmp.ne.s32.totalorder %s27, %s43
      %p45 = scmp.eq.s32.totalorder %s19, 0
      %p46 = por %p44, %p45
      %s47 = ssub.s32 %s13, %s20
      %p48 = scmp.eq.s32.totalorder %s47, 0
      %s50 = sadd.s32 %s49, 1
      %s51 = scalar_select %p48, %s49, %s50
      %p54 = pneg %p48
      %p55 = scmp.eq.s32.totalorder %s13, 1
      %p56 = por %p54, %p55
      %p57 = scmp.ne.s32.totalorder %s49, %s52
      %p58 = scmp.eq.s32.totalorder %s13, 0
      %p59 = por %p57, %p58
      %p60 = scmp.ne.s32.totalorder %s49, %s52
      %p61 = scmp.eq.s32.totalorder %s18, 1
      %p62 = por %p60, %p61
      %p63 = scmp.ne.s32.totalorder %s52, %s53
      %p64 = scmp.eq.s32.totalorder %s18, 0
      %p65 = por %p63, %p64
      %p66 = scmp.ne.s32.totalorder %s52, %s53
      %p67 = scmp.eq.s32.totalorder %s19, 1
      %p68 = por %p66, %p67
      %p70 = scmp.ne.s32.totalorder %s53, %s69
      %p71 = scmp.eq.s32.totalorder %s19, 0
      %p72 = por %p70, %p71
      %p73 = scmp.le.s32.totalorder 1, %s13
      %p74 = scmp.lt.s32.totalorder %s13, 3
      %p75 = pnand %p73, %p74
      %p76 = pneg %p75
      // Predicated region
      $region9: #{tpu_custom_call.1} parent=5 // pred_check
        _
      $region10: #{tpu_custom_call.1} parent=5 // pred_check_branch
        %78 = sbr.rel (%p75) target = $region12
      $region11: #{tpu_custom_call.1} parent=5 // pred_region
        %s79 = ssub.s32 %s13, 1
      $region12: #{tpu_custom_call.1} parent=5 // pred_fallthru
        _
      %p80 = scmp.lt.s32.totalorder %s13, 2
      // Predicated region
      $region13: #{tpu_custom_call.1} parent=5 // pred_check
        %p81 = pneg %p80
      $region14: #{tpu_custom_call.1} parent=5 // pred_check_branch
        %83 = sbr.rel (%p81) target = $region16
      $region15: #{tpu_custom_call.1} parent=5 // pred_region
        // Predicated region
        $region17: #{tpu_custom_call.1} parent=15 // pred_check
          %p84 = pneg %p33
        $region18: #{tpu_custom_call.1} parent=15 // pred_check_branch
          %86 = sbr.rel (%p84) target = $region20
        $region19: #{tpu_custom_call.1} parent=15 // pred_region
          %s87 = sand.u32 %s23, 1
          %s88 = scalar_lea.sflag [#allocation4], %s87
          %s89 = sand.u32 %s23, 1
          %s90 = smul.addr %s89, 48
          %s91 = scalar_lea.vmem [#allocation3], %s90
          %s93 = ssub.s32 768, 768
          %94 = vsyncadd %s88, %s93
          %s95 = smul.addr %s13, 6
          %s96 = smul.addr %s95, 128
          %s97 = scalar_lea.hbm %s0, %s96
          %s98 = sshll.u32 %s91, 4
          %s99 = int_to_ptr.vmem [resolvable:$true] %s98
          %104 = dma.hbm_to_vmem [thread:$0]  %s97, 768, %s99, %s88, 128, 128, 8
        $region20: #{tpu_custom_call.1} parent=15 // pred_fallthru
          _
      $region16: #{tpu_custom_call.1} parent=5 // pred_fallthru
        _
      %p105 = scmp.le.s32.totalorder 1, %s13
      %p106 = scmp.lt.s32.totalorder %s13, 3
      %p107 = pnand %p105, %p106
      %p108 = pneg %p107
      // Predicated region
      $region21: #{tpu_custom_call.1} parent=5 // pred_check
        _
      $region22: #{tpu_custom_call.1} parent=5 // pred_check_branch
        %110 = sbr.rel (%p107) target = $region24
      $region23: #{tpu_custom_call.1} parent=5 // pred_region
        %s111 = ssub.s32 %s13, 1
        %s112 = sand.u32 %s26, 1
        %s113 = scalar_lea.sflag [#allocation4], %s112
        %s114 = sand.u32 %s26, 1
        %s115 = smul.addr %s114, 48
        %s116 = scalar_lea.vmem [#allocation3], %s115
        // Predicated region
        $region25: #{tpu_custom_call.1} parent=23 // pred_check
          %p117 = pneg %p39
        $region26: #{tpu_custom_call.1} parent=23 // pred_check_branch
          %119 = sbr.rel (%p117) target = $region28
        $region27: #{tpu_custom_call.1} parent=23 // pred_region
          %120 = dma.done %s113, 768
        $region28: #{tpu_custom_call.1} parent=23 // pred_fallthru
          _
        %s121 = sand.u32 %s26, 1
        %s122 = scalar_lea.sflag [#allocation4], %s121
        %s123 = sand.u32 %s26, 1
        %s124 = smul.addr %s123, 48
        %s125 = scalar_lea.vmem [#allocation3], %s124
        %p126 = pneg %p39
        %p127 = pneg %p36
        %p128 = pneg %p65
        %p129 = pneg %p62
        %s130 = sand.u32 %s52, 1
        %s131 = scalar_lea.sflag [#allocation5], %s130
        %s132 = sand.u32 %s52, 1
        %s133 = smul.addr %s132, 16
        %s134 = scalar_lea.vmem [#allocation6], %s133
        %vm135 = vcmask 162816
        %136 = vst.msk [vmem:[#allocation2] sm:$0xff] %vm135, 0.0
        %137 = vst.msk [vmem:[#allocation2 + $0x8] sm:$0xff] %vm135, 0.0
        %vm138 = vcmask 158720
        %139 = vst.msk [vmem:[#allocation2 + $0x10] sm:$0xf] %vm138, 0.0
        %v140 = vld [vmem:[%s116] sm:$0xff]
        %v141 = vld [vmem:[%s116 + $0x8] sm:$0xff]
        %v142 = vmul.f32 %v140, 0.2989
        %v143 = vmul.f32 %v141, 0.2989
        %s144 = scalar_lea.vmem %s116, 16 [#allocation3]
        %v145 = vld [vmem:[%s144] sm:$0xff]
        %v146 = vld [vmem:[%s144 + $0x8] sm:$0xff]
        %v147 = vmul.f32 %v145, 0.587
        %v148 = vmul.f32 %v146, 0.587
        %v149 = vadd.f32 %v142, %v147
        %v150 = vadd.f32 %v143, %v148
        %s151 = scalar_lea.vmem %s116, 32 [#allocation3]
        %v152 = vld [vmem:[%s151] sm:$0xff]
        %v153 = vld [vmem:[%s151 + $0x8] sm:$0xff]
        %v154 = vmul.f32 %v152, 0.114
        %v155 = vmul.f32 %v153, 0.114
        %v156 = vadd.f32 %v149, %v154
        %v157 = vadd.f32 %v150, %v155
        %160 = vrot.lane.b32.xlu0 %v156, 2
        %v161 = vpop.permute.xlu0 %160
        %162 = vrot.lane.b32.xlu0 %v157, 2
        %v163 = vpop.permute.xlu0 %162
        %vm166 = vcmask 146448
        %167 = vst.msk [vmem:[#allocation2 + $0x2] sm:$0xff] %vm166, %v161
        %168 = vst.msk [vmem:[#allocation2 + $0xa] sm:$0xff] %vm166, %v163
        %v169 = vld [vmem:[#allocation2] sm:$0xff]
        %v170 = vld [vmem:[#allocation2 + $0x8] sm:$0xff]
        %v171 = vmul.f32 %v169, -0.083333336
        %v172 = vmul.f32 %v170, -0.083333336
        %v173 = vadd.f32 %v171, 0.0
        %v174 = vadd.f32 %v172, 0.0
        %v175 = vmul.f32 %v169, 0.16666667
        %v176 = vmul.f32 %v170, 0.16666667
        %179 = vrot.lane.b32.xlu0 %v175, 127
        %v180 = vpop.permute.xlu0 %179
        %181 = vrot.lane.b32.xlu0 %v176, 127
        %v182 = vpop.permute.xlu0 %181
        %v185 = vadd.f32 %v173, %v180
        %v186 = vadd.f32 %v174, %v182
        %v187 = vmul.f32 %v169, -0.16666667
        %v188 = vmul.f32 %v170, -0.16666667
        %191 = vrot.lane.b32.xlu0 %v187, 126
        %v192 = vpop.permute.xlu0 %191
        %193 = vrot.lane.b32.xlu0 %v188, 126
        %v194 = vpop.permute.xlu0 %193
        %v197 = vadd.f32 %v185, %v192
        %v198 = vadd.f32 %v186, %v194
        %199 = vrot.lane.b32.xlu0 %v175, 125
        %v200 = vpop.permute.xlu0 %199
        %201 = vrot.lane.b32.xlu0 %v176, 125
        %v202 = vpop.permute.xlu0 %201
        %v205 = vadd.f32 %v197, %v200
        %v206 = vadd.f32 %v198, %v202
        %209 = vrot.lane.b32.xlu0 %v171, 124
        %v210 = vpop.permute.xlu0 %209
        %211 = vrot.lane.b32.xlu0 %v172, 124
        %v212 = vpop.permute.xlu0 %211
        %v215 = vadd.f32 %v205, %v210
        %v216 = vadd.f32 %v206, %v212
        %v217 = vld [vmem:[#allocation2 + $0x1] sm:$0xff]
        %v218 = vld [vmem:[#allocation2 + $0x9] sm:$0xff]
        %v219 = vmul.f32 %v217, 0.16666667
        %v220 = vmul.f32 %v218, 0.16666667
        %v221 = vadd.f32 %v215, %v219
        %v222 = vadd.f32 %v216, %v220
        %v223 = vmul.f32 %v217, -0.5
        %v224 = vmul.f32 %v218, -0.5
        %227 = vrot.lane.b32.xlu0 %v223, 127
        %v228 = vpop.permute.xlu0 %227
        %229 = vrot.lane.b32.xlu0 %v224, 127
        %v230 = vpop.permute.xlu0 %229
        %v233 = vadd.f32 %v221, %v228
        %v234 = vadd.f32 %v222, %v230
        %v235 = vmul.f32 %v217, 0.6666667
        %v236 = vmul.f32 %v218, 0.6666667
        %239 = vrot.lane.b32.xlu0 %v235, 126
        %v240 = vpop.permute.xlu0 %239
        %241 = vrot.lane.b32.xlu0 %v236, 126
        %v242 = vpop.permute.xlu0 %241
        %v245 = vadd.f32 %v233, %v240
        %v246 = vadd.f32 %v234, %v242
        %247 = vrot.lane.b32.xlu0 %v223, 125
        %v248 = vpop.permute.xlu0 %247
        %249 = vrot.lane.b32.xlu0 %v224, 125
        %v250 = vpop.permute.xlu0 %249
        %v253 = vadd.f32 %v245, %v248
        %v254 = vadd.f32 %v246, %v250
        %257 = vrot.lane.b32.xlu0 %v219, 124
        %v258 = vpop.permute.xlu0 %257
        %259 = vrot.lane.b32.xlu0 %v220, 124
        %v260 = vpop.permute.xlu0 %259
        %v263 = vadd.f32 %v253, %v258
        %v264 = vadd.f32 %v254, %v260
        %v265 = vld [vmem:[#allocation2 + $0x2] sm:$0xff]
        %v266 = vld [vmem:[#allocation2 + $0xa] sm:$0xff]
        %v267 = vmul.f32 %v265, -0.16666667
        %v268 = vmul.f32 %v266, -0.16666667
        %v269 = vadd.f32 %v263, %v267
        %v270 = vadd.f32 %v264, %v268
        %v271 = vmul.f32 %v265, 0.6666667
        %v272 = vmul.f32 %v266, 0.6666667
        %275 = vrot.lane.b32.xlu0 %v271, 127
        %v276 = vpop.permute.xlu0 %275
        %277 = vrot.lane.b32.xlu0 %v272, 127
        %v278 = vpop.permute.xlu0 %277
        %v281 = vadd.f32 %v269, %v276
        %v282 = vadd.f32 %v270, %v278
        %v283 = vmul.f32 %v265, -1.0
        %v284 = vmul.f32 %v266, -1.0
        %287 = vrot.lane.b32.xlu0 %v283, 126
        %v288 = vpop.permute.xlu0 %287
        %289 = vrot.lane.b32.xlu0 %v284, 126
        %v290 = vpop.permute.xlu0 %289
        %v293 = vadd.f32 %v281, %v288
        %v294 = vadd.f32 %v282, %v290
        %295 = vrot.lane.b32.xlu0 %v271, 125
        %v296 = vpop.permute.xlu0 %295
        %297 = vrot.lane.b32.xlu0 %v272, 125
        %v298 = vpop.permute.xlu0 %297
        %v301 = vadd.f32 %v293, %v296
        %v302 = vadd.f32 %v294, %v298
        %305 = vrot.lane.b32.xlu0 %v267, 124
        %v306 = vpop.permute.xlu0 %305
        %307 = vrot.lane.b32.xlu0 %v268, 124
        %v308 = vpop.permute.xlu0 %307
        %v311 = vadd.f32 %v301, %v306
        %v312 = vadd.f32 %v302, %v308
        %v313 = vld [vmem:[#allocation2 + $0x3] sm:$0xff]
        %v314 = vld [vmem:[#allocation2 + $0xb] sm:$0xff]
        %v315 = vmul.f32 %v313, 0.16666667
        %v316 = vmul.f32 %v314, 0.16666667
        %v317 = vadd.f32 %v311, %v315
        %v318 = vadd.f32 %v312, %v316
        %v319 = vmul.f32 %v313, -0.5
        %v320 = vmul.f32 %v314, -0.5
        %323 = vrot.lane.b32.xlu0 %v319, 127
        %v324 = vpop.permute.xlu0 %323
        %325 = vrot.lane.b32.xlu0 %v320, 127
        %v326 = vpop.permute.xlu0 %325
        %v329 = vadd.f32 %v317, %v324
        %v330 = vadd.f32 %v318, %v326
        %v331 = vmul.f32 %v313, 0.6666667
        %v332 = vmul.f32 %v314, 0.6666667
        %335 = vrot.lane.b32.xlu0 %v331, 126
        %v336 = vpop.permute.xlu0 %335
        %337 = vrot.lane.b32.xlu0 %v332, 126
        %v338 = vpop.permute.xlu0 %337
        %v341 = vadd.f32 %v329, %v336
        %v342 = vadd.f32 %v330, %v338
        %343 = vrot.lane.b32.xlu0 %v319, 125
        %v344 = vpop.permute.xlu0 %343
        %345 = vrot.lane.b32.xlu0 %v320, 125
        %v346 = vpop.permute.xlu0 %345
        %v349 = vadd.f32 %v341, %v344
        %v350 = vadd.f32 %v342, %v346
        %353 = vrot.lane.b32.xlu0 %v315, 124
        %v354 = vpop.permute.xlu0 %353
        %355 = vrot.lane.b32.xlu0 %v316, 124
        %v356 = vpop.permute.xlu0 %355
        %v359 = vadd.f32 %v349, %v354
        %v360 = vadd.f32 %v350, %v356
        %v361 = vld [vmem:[#allocation2 + $0x4] sm:$0xff]
        %v362 = vld [vmem:[#allocation2 + $0xc] sm:$0xff]
        %v363 = vmul.f32 %v361, -0.083333336
        %v364 = vmul.f32 %v362, -0.083333336
        %v365 = vadd.f32 %v359, %v363
        %v366 = vadd.f32 %v360, %v364
        %v367 = vmul.f32 %v361, 0.16666667
        %v368 = vmul.f32 %v362, 0.16666667
        %371 = vrot.lane.b32.xlu0 %v367, 127
        %v372 = vpop.permute.xlu0 %371
        %373 = vrot.lane.b32.xlu0 %v368, 127
        %v374 = vpop.permute.xlu0 %373
        %v377 = vadd.f32 %v365, %v372
        %v378 = vadd.f32 %v366, %v374
        %v379 = vmul.f32 %v361, -0.16666667
        %v380 = vmul.f32 %v362, -0.16666667
        %383 = vrot.lane.b32.xlu0 %v379, 126
        %v384 = vpop.permute.xlu0 %383
        %385 = vrot.lane.b32.xlu0 %v380, 126
        %v386 = vpop.permute.xlu0 %385
        %v389 = vadd.f32 %v377, %v384
        %v390 = vadd.f32 %v378, %v386
        %391 = vrot.lane.b32.xlu0 %v367, 125
        %v392 = vpop.permute.xlu0 %391
        %393 = vrot.lane.b32.xlu0 %v368, 125
        %v394 = vpop.permute.xlu0 %393
        %v397 = vadd.f32 %v389, %v392
        %v398 = vadd.f32 %v390, %v394
        %401 = vrot.lane.b32.xlu0 %v363, 124
        %v402 = vpop.permute.xlu0 %401
        %403 = vrot.lane.b32.xlu0 %v364, 124
        %v404 = vpop.permute.xlu0 %403
        %v407 = vadd.f32 %v397, %v402
        %v408 = vadd.f32 %v398, %v404
        %vm409 = vcmask 130048
        %410 = vst.msk [vmem:[%s134] sm:$0xff] %vm409, %v407
        %411 = vst.msk [vmem:[%s134 + $0x8] sm:$0xff] %vm409, %v408
        %s412 = sand.u32 %s52, 1
        %s413 = scalar_lea.sflag [#allocation5], %s412
        %s414 = sand.u32 %s52, 1
        %s415 = smul.addr %s414, 16
        %s416 = scalar_lea.vmem [#allocation6], %s415
        // Predicated region
        $region29: #{tpu_custom_call.1} parent=23 // pred_check
          %p417 = pneg %p62
        $region30: #{tpu_custom_call.1} parent=23 // pred_check_branch
          %419 = sbr.rel (%p417) target = $region32
        $region31: #{tpu_custom_call.1} parent=23 // pred_region
          %s421 = ssub.s32 256, 256
          %422 = vsyncadd %s413, %s421
          %s423 = smul.addr %s18, 2
          %s424 = smul.addr %s423, 128
          %s425 = scalar_lea.hbm %s1, %s424
          %s426 = sshll.u32 %s416, 4
          %s427 = int_to_ptr.vmem [resolvable:$true] %s426
          %432 = dma.vmem_to_hbm [thread:$0]  %s427, 256, %s425, %s413, 128, 128, 8
        $region32: #{tpu_custom_call.1} parent=23 // pred_fallthru
          _
      $region24: #{tpu_custom_call.1} parent=5 // pred_fallthru
        _
      %p433 = scmp.le.s32.totalorder 2, %s13
      // Predicated region
      $region33: #{tpu_custom_call.1} parent=5 // pred_check
        %p434 = pneg %p433
      $region34: #{tpu_custom_call.1} parent=5 // pred_check_branch
        %436 = sbr.rel (%p434) target = $region36
      $region35: #{tpu_custom_call.1} parent=5 // pred_region
        %s437 = ssub.s32 %s13, 2
        // Predicated region
        $region37: #{tpu_custom_call.1} parent=35 // pred_check
          %p438 = pneg %p68
        $region38: #{tpu_custom_call.1} parent=35 // pred_check_branch
          %440 = sbr.rel (%p438) target = $region40
        $region39: #{tpu_custom_call.1} parent=35 // pred_region
          %s441 = sand.u32 %s53, 1
          %s442 = scalar_lea.sflag [#allocation5], %s441
          %s443 = sand.u32 %s53, 1
          %s444 = smul.addr %s443, 16
          %s445 = scalar_lea.vmem [#allocation6], %s444
          %446 = dma.done %s442, 256
        $region40: #{tpu_custom_call.1} parent=35 // pred_fallthru
          _
      $region36: #{tpu_custom_call.1} parent=5 // pred_fallthru
        _
    $region6: #{tpu_custom_call.1} parent=1 // loop_footer
      %s17 = sadd.s32 1, %s13
    $region7: #{tpu_custom_call.1} parent=1 // loop_footer_branch
      %12 = sbr.rel target = $region3
    $region8: #{tpu_custom_call.1} parent=1 // loop_exit
      _
    %447 = vsyncpa [#allocation4], 1
    %s448 = scalar_lea.sflag [#allocation4], 1
    %449 = vsyncpa %s448, 1
    %450 = vsyncpa [#allocation5], 1
    %s451 = scalar_lea.sflag [#allocation5], 1
    %452 = vsyncpa %s451, 1

</llo_original>
